<compile_context>
chip_gen: v6e
topology: v6e:2x2x1
jax: 0.10.0
libtpu: 0.0.40
codegen_flags: <defaults>
</compile_context>

<pallas_src>
import jax
import jax.numpy as jnp
from jax.experimental import pallas as pl
from jax.experimental.pallas import tpu as pltpu


def _minmax_fusion_kernel(x1_ref, x2_ref, x3_ref, wmax_ref, wmin_ref, wmean_ref, o_ref):
    # x*_ref: [dim, TK] channel-major tiles (spatial axis in lanes).
    # w*_ref: [dim, dim] slices of the 1x1-conv weight; wmean already carries the 1/3.
    a = x1_ref[...]
    b = x2_ref[...]
    c = x3_ref[...]

    # Elementwise stage in the native input dtype (bf16 VALU exists on v6e/v7x; the
    # f32 test inputs stay f32 which is also what v5e requires).
    mx = jnp.maximum(jnp.maximum(a, b), c)
    mn = jnp.minimum(jnp.minimum(a, b), c)
    sm = a + b + c  # the 1/3 is folded into wmean

    out = (
        jnp.dot(wmax_ref[...], mx, preferred_element_type=jnp.float32)
        + jnp.dot(wmin_ref[...], mn, preferred_element_type=jnp.float32)
        + jnp.dot(wmean_ref[...], sm, preferred_element_type=jnp.float32)
    )
    o_ref[...] = out.astype(o_ref.dtype)


def _pick_spatial_tile(hw, dim, itemsize, vmem_budget_bytes):
    """Largest lane tile TK that fits the VMEM budget (multiple of 128, or full HW)."""
    # Double-buffered weight blocks (3 x [dim, dim]):
    weight_bytes = 2 * 3 * dim * dim * itemsize
    # Per spatial column: (3 inputs + 1 output) double-buffered blocks + ~4 f32
    # compute temporaries (max / min / sum / f32 accumulator).
    per_col = 8 * dim * itemsize + 4 * dim * 4
    cap = (vmem_budget_bytes - weight_bytes) // per_col
    cap = max(128, min(int(cap), 16384))
    cap = (cap // 128) * 128

    if hw <= cap:
        return hw, 1  # single full-extent tile: always layout-legal
    tk = cap
    if hw % 128 == 0:
        # Prefer an exact divisor to avoid a ragged tail block.
        while hw % tk != 0:
            tk -= 128
    # Ragged tail (hw % tk != 0) is fine: each output column depends only on the same
    # input column, so padded/clamped edge columns never pollute valid results.
    return tk, pl.cdiv(hw, tk)


def minmax_fusion(xs, weight, *, vmem_budget_bytes=40 * 1024 * 1024):
    """xs: list of 3 arrays, each [B, dim, H, W] (NCHW).
    weight: [dim, 3*dim] (PyTorch Conv2d(3*dim, dim, 1, bias=False) weight, squeezed).
    Returns [B, dim, H, W]."""
    assert len(xs) == 3
    B, C, H, W = xs[0].shape
    dim = C
    assert weight.shape == (dim, 3 * dim)
    HW = H * W
    dtype = xs[0].dtype
    itemsize = jnp.dtype(dtype).itemsize

    # Free reshapes (contiguous trailing dims) — no HBM traffic, unlike transposes.
    x1, x2, x3 = (x.reshape(B, C, HW) for x in xs)

    # Split the conv weight into the three [dim, dim] blocks matching the concat order
    # [max | min | mean]; fold the mean's 1/3 into its weight block (one-time, tiny).
    w = weight.astype(dtype)
    w_max = w[:, 0:dim]
    w_min = w[:, dim:2 * dim]
    w_mean = w[:, 2 * dim:3 * dim] * jnp.asarray(1.0 / 3.0, dtype=dtype)

    tk, ns = _pick_spatial_tile(HW, dim, itemsize, vmem_budget_bytes)
    grid = (B, ns)

    x_spec = pl.BlockSpec((None, dim, tk), lambda b, s: (b, 0, s))
    w_spec = pl.BlockSpec((dim, dim), lambda b, s: (0, 0))  # constant block: fetched once

    out = pl.pallas_call(
        _minmax_fusion_kernel,
        out_shape=jax.ShapeDtypeStruct((B, dim, HW), dtype),
        grid_spec=pltpu.PrefetchScalarGridSpec(
            num_scalar_prefetch=0,
            grid=grid,
            in_specs=[x_spec, x_spec, x_spec, w_spec, w_spec, w_spec],
            out_specs=pl.BlockSpec((None, dim, tk), lambda b, s: (b, 0, s)),
        ),
        compiler_params=pltpu.CompilerParams(
            dimension_semantics=("parallel", "parallel"),
            # Explicit scoped-VMEM limit: above the v5e (16 MiB) / v6e,v7x (32 MiB)
            # defaults, but with headroom under v7x's 64 MiB physical VMEM.
            vmem_limit_bytes=48 * 1024 * 1024,
        ),
    )(x1, x2, x3, w_max, w_min, w_mean)

    return out.reshape(B, dim, H, W)


def _reference(xs, weight):
    a, b, c = [x.astype(jnp.float32) for x in xs]
    mx = jnp.maximum(jnp.maximum(a, b), c)
    mn = jnp.minimum(jnp.minimum(a, b), c)
    me = (a + b + c) / 3.0
    cat = jnp.concatenate([mx, mn, me], axis=1)  # [B, 3*dim, H, W]
    # 1x1 conv, no bias: contraction over channels.
    return jnp.einsum("oi,bihw->bohw", weight.astype(jnp.float32), cat)


if __name__ == "__main__":
    key = jax.random.PRNGKey(0)
    B, dim, H, W = 2, 4, 16, 16

    k1, k2, k3, kw = jax.random.split(key, 4)
    x1 = jax.random.normal(k1, (B, dim, H, W), dtype=jnp.float32)
    x2 = jax.random.normal(k2, (B, dim, H, W), dtype=jnp.float32)
    x3 = jax.random.normal(k3, (B, dim, H, W), dtype=jnp.float32)

    # Deterministic Conv2d(3*dim, dim, 1, bias=False) weight, kaiming-uniform-ish.
    fan_in = 3 * dim
    bound = (1.0 / fan_in) ** 0.5
    weight = jax.random.uniform(
        kw, (dim, 3 * dim), dtype=jnp.float32, minval=-bound, maxval=bound
    )

    out = minmax_fusion([x1, x2, x3], weight)
    out = jax.block_until_ready(out)

    ref = _reference([x1, x2, x3], weight)
    assert out.shape == (B, dim, H, W)
    assert jnp.allclose(out, ref, atol=1e-5, rtol=1e-5)

    print("KERNEL_OK")
</pallas_src>

<mosaic_0001>
module attributes {stable_mosaic.version = 11 : i64} {
  func.func @_minmax_fusion_kernel(%arg0: i32, %arg1: i32, %arg2: memref<1x4x256xf32, #tpu.memory_space<vmem>>, %arg3: memref<1x4x256xf32, #tpu.memory_space<vmem>>, %arg4: memref<1x4x256xf32, #tpu.memory_space<vmem>>, %arg5: memref<4x4xf32, #tpu.memory_space<vmem>>, %arg6: memref<4x4xf32, #tpu.memory_space<vmem>>, %arg7: memref<4x4xf32, #tpu.memory_space<vmem>>, %arg8: memref<1x4x256xf32, #tpu.memory_space<vmem>>) attributes {dimension_semantics = [#tpu.dimension_semantics<parallel>, #tpu.dimension_semantics<parallel>], iteration_bounds = array<i64: 2, 1>, scalar_prefetch = 0 : i64, scratch_operands = 0 : i64, tpu.core_type = #tpu.core_type<tc>, window_params = [{transform_indices = @transform_0, window_bounds = array<i64: 1, 4, 256>}, {transform_indices = @transform_1, window_bounds = array<i64: 1, 4, 256>}, {transform_indices = @transform_2, window_bounds = array<i64: 1, 4, 256>}, {pipeline_mode = #tpu.pipeline_mode<synchronous>, transform_indices = @transform_3, window_bounds = array<i64: 4, 4>}, {pipeline_mode = #tpu.pipeline_mode<synchronous>, transform_indices = @transform_4, window_bounds = array<i64: 4, 4>}, {pipeline_mode = #tpu.pipeline_mode<synchronous>, transform_indices = @transform_5, window_bounds = array<i64: 4, 4>}, {transform_indices = @transform_6, window_bounds = array<i64: 1, 4, 256>}]} {
    %c0 = arith.constant 0 : index
    %c0_0 = arith.constant 0 : index
    %c0_1 = arith.constant 0 : index
    %0 = vector.load %arg2[%c0, %c0_0, %c0_1] : memref<1x4x256xf32, #tpu.memory_space<vmem>>, vector<1x4x256xf32>
    %1 = vector.shape_cast %0 : vector<1x4x256xf32> to vector<4x256xf32>
    %c0_2 = arith.constant 0 : index
    %c0_3 = arith.constant 0 : index
    %c0_4 = arith.constant 0 : index
    %2 = vector.load %arg3[%c0_2, %c0_3, %c0_4] : memref<1x4x256xf32, #tpu.memory_space<vmem>>, vector<1x4x256xf32>
    %3 = vector.shape_cast %2 : vector<1x4x256xf32> to vector<4x256xf32>
    %c0_5 = arith.constant 0 : index
    %c0_6 = arith.constant 0 : index
    %c0_7 = arith.constant 0 : index
    %4 = vector.load %arg4[%c0_5, %c0_6, %c0_7] : memref<1x4x256xf32, #tpu.memory_space<vmem>>, vector<1x4x256xf32>
    %5 = vector.shape_cast %4 : vector<1x4x256xf32> to vector<4x256xf32>
    %6 = arith.maximumf %1, %3 : vector<4x256xf32>
    %7 = arith.maximumf %6, %5 : vector<4x256xf32>
    %8 = arith.minimumf %1, %3 : vector<4x256xf32>
    %9 = arith.minimumf %8, %5 : vector<4x256xf32>
    %10 = arith.addf %1, %3 : vector<4x256xf32>
    %11 = arith.addf %10, %5 : vector<4x256xf32>
    %c0_8 = arith.constant 0 : index
    %c0_9 = arith.constant 0 : index
    %12 = vector.load %arg5[%c0_8, %c0_9] : memref<4x4xf32, #tpu.memory_space<vmem>>, vector<4x4xf32>
    %cst = arith.constant dense<0.000000e+00> : vector<4x256xf32>
    %13 = tpu.matmul %12, %7, %cst {dimension_numbers = #tpu.dot_dimension_numbers<[1], [0], [0], [1], [0, 0, 1, 1], [], []>} : vector<4x4xf32>, vector<4x256xf32>, vector<4x256xf32> -> vector<4x256xf32>
    %c0_10 = arith.constant 0 : index
    %c0_11 = arith.constant 0 : index
    %14 = vector.load %arg6[%c0_10, %c0_11] : memref<4x4xf32, #tpu.memory_space<vmem>>, vector<4x4xf32>
    %cst_12 = arith.constant dense<0.000000e+00> : vector<4x256xf32>
    %15 = tpu.matmul %14, %9, %cst_12 {dimension_numbers = #tpu.dot_dimension_numbers<[1], [0], [0], [1], [0, 0, 1, 1], [], []>} : vector<4x4xf32>, vector<4x256xf32>, vector<4x256xf32> -> vector<4x256xf32>
    %16 = arith.addf %13, %15 : vector<4x256xf32>
    %c0_13 = arith.constant 0 : index
    %c0_14 = arith.constant 0 : index
    %17 = vector.load %arg7[%c0_13, %c0_14] : memref<4x4xf32, #tpu.memory_space<vmem>>, vector<4x4xf32>
    %cst_15 = arith.constant dense<0.000000e+00> : vector<4x256xf32>
    %18 = tpu.matmul %17, %11, %cst_15 {dimension_numbers = #tpu.dot_dimension_numbers<[1], [0], [0], [1], [0, 0, 1, 1], [], []>} : vector<4x4xf32>, vector<4x256xf32>, vector<4x256xf32> -> vector<4x256xf32>
    %19 = arith.addf %16, %18 : vector<4x256xf32>
    %c0_16 = arith.constant 0 : index
    %c0_17 = arith.constant 0 : index
    %c0_18 = arith.constant 0 : index
    %20 = vector.load %arg8[%c0_16, %c0_17, %c0_18] : memref<1x4x256xf32, #tpu.memory_space<vmem>>, vector<1x4x256xf32>
    %21 = vector.shape_cast %20 : vector<1x4x256xf32> to vector<4x256xf32>
    %22 = vector.shape_cast %19 : vector<4x256xf32> to vector<1x4x256xf32>
    tpu.vector_store %arg8[%c0_16, %c0_17, %c0_18], %22 {strides = array<i32>} : memref<1x4x256xf32, #tpu.memory_space<vmem>>, vector<1x4x256xf32>,
    return
  }
  func.func @transform_0(%arg0: i32, %arg1: i32) -> (i32, i32, i32) {
    %c0_i32 = arith.constant 0 : i32
    %c0_i32_0 = arith.constant 0 : i32
    return %arg0, %c0_i32, %arg1 : i32, i32, i32
  }
  func.func @transform_1(%arg0: i32, %arg1: i32) -> (i32, i32, i32) {
    %c0_i32 = arith.constant 0 : i32
    %c0_i32_0 = arith.constant 0 : i32
    return %arg0, %c0_i32, %arg1 : i32, i32, i32
  }
  func.func @transform_2(%arg0: i32, %arg1: i32) -> (i32, i32, i32) {
    %c0_i32 = arith.constant 0 : i32
    %c0_i32_0 = arith.constant 0 : i32
    return %arg0, %c0_i32, %arg1 : i32, i32, i32
  }
  func.func @transform_3(%arg0: i32, %arg1: i32) -> (i32, i32) {
    %c0_i32 = arith.constant 0 : i32
    %c0_i32_0 = arith.constant 0 : i32
    %c0_i32_1 = arith.constant 0 : i32
    return %c0_i32, %c0_i32_0 : i32, i32
  }
  func.func @transform_4(%arg0: i32, %arg1: i32) -> (i32, i32) {
    %c0_i32 = arith.constant 0 : i32
    %c0_i32_0 = arith.constant 0 : i32
    %c0_i32_1 = arith.constant 0 : i32
    return %c0_i32, %c0_i32_0 : i32, i32
  }
  func.func @transform_5(%arg0: i32, %arg1: i32) -> (i32, i32) {
    %c0_i32 = arith.constant 0 : i32
    %c0_i32_0 = arith.constant 0 : i32
    %c0_i32_1 = arith.constant 0 : i32
    return %c0_i32, %c0_i32_0 : i32, i32
  }
  func.func @transform_6(%arg0: i32, %arg1: i32) -> (i32, i32, i32) {
    %c0_i32 = arith.constant 0 : i32
    %c0_i32_0 = arith.constant 0 : i32
    return %arg0, %c0_i32, %arg1 : i32, i32, i32
  }
}

</mosaic_0001>

<llo_original>
// kernel: tpu_custom_call.1
$region0: #{tpu_custom_call.1}
  #allocation0 [shape = 'u32[]', space=smem, size = 0x4, offset = 0x4, fixed_abs, tag = 'smem constant byte address 0x4 - core index']
  #allocation1 [shape = 'u32[144,128]{1,0:T(1,128)}', space=vmem, size = 0x12000, scoped, tag = 'internal scratch']
  %s0 = inlined_call_operand.hbm [shape: f32[2,4,256], index: 0, kind: input, shape index: {}]
  %s1 = inlined_call_operand.hbm [shape: f32[2,4,256], index: 1, kind: input, shape index: {}]
  %s2 = inlined_call_operand.hbm [shape: f32[2,4,256], index: 2, kind: input, shape index: {}]
  %s3 = inlined_call_operand.vmem [shape: f32[4,4], index: 3, kind: input, shape index: {}]
  %s4 = inlined_call_operand.hbm [shape: f32[4,4], index: 4, kind: input, shape index: {}]
  %s5 = inlined_call_operand.vmem [shape: f32[4,4], index: 5, kind: input, shape index: {}]
  %s6 = inlined_call_operand.hbm [shape: f32[2,4,256], index: 6, kind: output, shape index: {}]
  %s7 = sld [smem:[#allocation0]]
  $region73: #{tpu_custom_call.1} parent=0
    _
  %s9 = ssub.s32 1, %s7
  %s10 = scalar_select 0, %s9, %s7
  $region1: #{tpu_custom_call.1} parent=0
    #allocation2 [shape = 'u8[8192]{0}', space=vmem, size = 0x2000, scoped, tag = 'input window, operand 0']
    #allocation3 [shape = 's32[2]{0}', space=sflag, size = 0x8, scoped, tag = 'scoped memory for tpu_custom_call.1']
    #allocation4 [shape = 's32[2]{0}', space=sflag, size = 0x8, scoped, tag = 'scoped memory for tpu_custom_call.1']
    #allocation5 [shape = 'u8[8192]{0}', space=vmem, size = 0x2000, scoped, tag = 'input window, operand 1']
    #allocation6 [shape = 's32[2]{0}', space=sflag, size = 0x8, scoped, tag = 'scoped memory for tpu_custom_call.1']
    #allocation7 [shape = 'u8[8192]{0}', space=vmem, size = 0x2000, scoped, tag = 'input window, operand 2']
    #allocation8 [shape = 'u8[2048]{0}', space=vmem, size = 0x800, scoped, tag = 'input window, operand 4, single buffered']
    #allocation9 [shape = 's32[1]{0}', space=sflag, size = 0x4, scoped, tag = 'scoped memory for tpu_custom_call.1']
    #allocation10 [shape = 'u8[8192]{0}', space=vmem, size = 0x2000, scoped, tag = 'output window, operand 0']
    %11 = vsyncpa [#allocation3], 0
    %s12 = scalar_lea.sflag [#allocation3], 1
    %13 = vsyncpa %s12, 0
    %14 = vsyncpa [#allocation6], 0
    %s15 = scalar_lea.sflag [#allocation6], 1
    %16 = vsyncpa %s15, 0
    %17 = vsyncpa [#allocation9], 0
    %18 = vsyncpa [#allocation4], 0
    %s19 = scalar_lea.sflag [#allocation4], 1
    %20 = vsyncpa %s19, 0
    loop: start=0, step=1, limit=4
    $region2: #{tpu_custom_call.1} parent=1 // loop_pre_header
      _
    $region3: #{tpu_custom_call.1} parent=1 // loop_header
      %s22 = sphi 0, %s26
      %p23 = scmp.ge.s32.totalorder %s22, 4
      %s29 = sphi 0, %s41
      %s30 = sphi 0, %s37
      %s31 = sphi 0, %s29
      %s32 = sphi 0, %s30
      %s33 = sphi 0, %s31
      %s34 = sphi 0, %s32
      %s46 = sphi 0, %s48
      %s49 = sphi 0, %s46
      %s50 = sphi 0, %s49
      %s66 = sphi 0, %s50
      %s74 = sphi 0, %s76
      %s77 = sphi 0, %s74
      %s78 = sphi 0, %s77
      %s94 = sphi 0, %s78
      %s102 = sphi 0, %s104
      %s105 = sphi 0, %s102
      %s106 = sphi 0, %s105
      %s122 = sphi 0, %s106
      %s126 = sphi 0, %s126
      %s128 = sphi 0, %s126
      %s129 = sphi 0, %s128
      %s143 = sphi 0, %s129
      %s147 = sphi 0, %s147
      %s149 = sphi 0, %s147
      %s150 = sphi 0, %s149
      %s164 = sphi 0, %s150
      %s168 = sphi 0, %s168
      %s170 = sphi 0, %s168
      %s171 = sphi 0, %s170
      %s185 = sphi 0, %s171
      %s193 = sphi 0, %s195
      %s196 = sphi 0, %s193
      %s197 = sphi 0, %s196
      %s213 = sphi 0, %s197
    $region4: #{tpu_custom_call.1} parent=1 // loop_header_branch
      %25 = sbr.rel (%p23) target = $region8
    $region5: #{tpu_custom_call.1} parent=1 // loop_body
      %s27 = ssub.s32 %s22, 1
      %s28 = ssub.s32 %s22, 2
      %s35 = sadd.s32 1, %s30
      %p36 = scmp.ge.s32.totalorder %s35, 1
      %s37 = scalar_select %p36, 0, %s35
      %s38 = sadd.s32 1, %s29
      %s39 = scalar_select %p36, %s38, %s29
      %p40 = scmp.ge.s32.totalorder %s39, 2
      %s41 = scalar_select %p40, 0, %s39
      %s42 = ssub.s32 %s29, %s41
      %s43 = ssub.s32 %s30, %s37
      %s44 = sor.u32 %s42, %s43
      %p45 = scmp.eq.s32.totalorder %s44, 0
      %s47 = sadd.s32 %s46, 1
      %s48 = scalar_select %p45, %s46, %s47
      %p51 = pneg %p45
      %p52 = scmp.eq.s32.totalorder %s22, 1
      %p53 = por %p51, %p52
      %p54 = scmp.ne.s32.totalorder %s46, %s49
      %p55 = scmp.eq.s32.totalorder %s22, 0
      %p56 = por %p54, %p55
      %p57 = scmp.ne.s32.totalorder %s46, %s49
      %p58 = scmp.eq.s32.totalorder %s27, 1
      %p59 = por %p57, %p58
      %p60 = scmp.ne.s32.totalorder %s49, %s50
      %p61 = scmp.eq.s32.totalorder %s27, 0
      %p62 = por %p60, %p61
      %p63 = scmp.ne.s32.totalorder %s49, %s50
      %p64 = scmp.eq.s32.totalorder %s28, 1
      %p65 = por %p63, %p64
      %p67 = scmp.ne.s32.totalorder %s50, %s66
      %p68 = scmp.eq.s32.totalorder %s28, 0
      %p69 = por %p67, %p68
      %s70 = ssub.s32 %s29, %s41
      %s71 = ssub.s32 %s30, %s37
      %s72 = sor.u32 %s70, %s71
      %p73 = scmp.eq.s32.totalorder %s72, 0
      %s75 = sadd.s32 %s74, 1
      %s76 = scalar_select %p73, %s74, %s75
      %p79 = pneg %p73
      %p80 = scmp.eq.s32.totalorder %s22, 1
      %p81 = por %p79, %p80
      %p82 = scmp.ne.s32.totalorder %s74, %s77
      %p83 = scmp.eq.s32.totalorder %s22, 0
      %p84 = por %p82, %p83
      %p85 = scmp.ne.s32.totalorder %s74, %s77
      %p86 = scmp.eq.s32.totalorder %s27, 1
      %p87 = por %p85, %p86
      %p88 = scmp.ne.s32.totalorder %s77, %s78
      %p89 = scmp.eq.s32.totalorder %s27, 0
      %p90 = por %p88, %p89
      %p91 = scmp.ne.s32.totalorder %s77, %s78
      %p92 = scmp.eq.s32.totalorder %s28, 1
      %p93 = por %p91, %p92
      %p95 = scmp.ne.s32.totalorder %s78, %s94
      %p96 = scmp.eq.s32.totalorder %s28, 0
      %p97 = por %p95, %p96
      %s98 = ssub.s32 %s29, %s41
      %s99 = ssub.s32 %s30, %s37
      %s100 = sor.u32 %s98, %s99
      %p101 = scmp.eq.s32.totalorder %s100, 0
      %s103 = sadd.s32 %s102, 1
      %s104 = scalar_select %p101, %s102, %s103
      %p107 = pneg %p101
      %p108 = scmp.eq.s32.totalorder %s22, 1
      %p109 = por %p107, %p108
      %p110 = scmp.ne.s32.totalorder %s102, %s105
      %p111 = scmp.eq.s32.totalorder %s22, 0
      %p112 = por %p110, %p111
      %p113 = scmp.ne.s32.totalorder %s102, %s105
      %p114 = scmp.eq.s32.totalorder %s27, 1
      %p115 = por %p113, %p114
      %p116 = scmp.ne.s32.totalorder %s105, %s106
      %p117 = scmp.eq.s32.totalorder %s27, 0
      %p118 = por %p116, %p117
      %p119 = scmp.ne.s32.totalorder %s105, %s106
      %p120 = scmp.eq.s32.totalorder %s28, 1
      %p121 = por %p119, %p120
      %p123 = scmp.ne.s32.totalorder %s106, %s122
      %p124 = scmp.eq.s32.totalorder %s28, 0
      %p125 = por %p123, %p124
      %s127 = sadd.s32 %s126, 1
      %p130 = scmp.eq.s32.totalorder %s22, 1
      %p131 = scmp.ne.s32.totalorder %s126, %s128
      %p132 = scmp.eq.s32.totalorder %s22, 0
      %p133 = por %p131, %p132
      %p134 = scmp.ne.s32.totalorder %s126, %s128
      %p135 = scmp.eq.s32.totalorder %s27, 1
      %p136 = por %p134, %p135
      %p137 = scmp.ne.s32.totalorder %s128, %s129
      %p138 = scmp.eq.s32.totalorder %s27, 0
      %p139 = por %p137, %p138
      %p140 = scmp.ne.s32.totalorder %s128, %s129
      %p141 = scmp.eq.s32.totalorder %s28, 1
      %p142 = por %p140, %p141
      %p144 = scmp.ne.s32.totalorder %s129, %s143
      %p145 = scmp.eq.s32.totalorder %s28, 0
      %p146 = por %p144, %p145
      %s148 = sadd.s32 %s147, 1
      %p151 = scmp.eq.s32.totalorder %s22, 1
      %p152 = scmp.ne.s32.totalorder %s147, %s149
      %p153 = scmp.eq.s32.totalorder %s22, 0
      %p154 = por %p152, %p153
      %p155 = scmp.ne.s32.totalorder %s147, %s149
      %p156 = scmp.eq.s32.totalorder %s27, 1
      %p157 = por %p155, %p156
      %p158 = scmp.ne.s32.totalorder %s149, %s150
      %p159 = scmp.eq.s32.totalorder %s27, 0
      %p160 = por %p158, %p159
      %p161 = scmp.ne.s32.totalorder %s149, %s150
      %p162 = scmp.eq.s32.totalorder %s28, 1
      %p163 = por %p161, %p162
      %p165 = scmp.ne.s32.totalorder %s150, %s164
      %p166 = scmp.eq.s32.totalorder %s28, 0
      %p167 = por %p165, %p166
      %s169 = sadd.s32 %s168, 1
      %p172 = scmp.eq.s32.totalorder %s22, 1
      %p173 = scmp.ne.s32.totalorder %s168, %s170
      %p174 = scmp.eq.s32.totalorder %s22, 0
      %p175 = por %p173, %p174
      %p176 = scmp.ne.s32.totalorder %s168, %s170
      %p177 = scmp.eq.s32.totalorder %s27, 1
      %p178 = por %p176, %p177
      %p179 = scmp.ne.s32.totalorder %s170, %s171
      %p180 = scmp.eq.s32.totalorder %s27, 0
      %p181 = por %p179, %p180
      %p182 = scmp.ne.s32.totalorder %s170, %s171
      %p183 = scmp.eq.s32.totalorder %s28, 1
      %p184 = por %p182, %p183
      %p186 = scmp.ne.s32.totalorder %s171, %s185
      %p187 = scmp.eq.s32.totalorder %s28, 0
      %p188 = por %p186, %p187
      %s189 = ssub.s32 %s29, %s41
      %s190 = ssub.s32 %s30, %s37
      %s191 = sor.u32 %s189, %s190
      %p192 = scmp.eq.s32.totalorder %s191, 0
      %s194 = sadd.s32 %s193, 1
      %s195 = scalar_select %p192, %s193, %s194
      %p198 = pneg %p192
      %p199 = scmp.eq.s32.totalorder %s22, 1
      %p200 = por %p198, %p199
      %p201 = scmp.ne.s32.totalorder %s193, %s196
      %p202 = scmp.eq.s32.totalorder %s22, 0
      %p203 = por %p201, %p202
      %p204 = scmp.ne.s32.totalorder %s193, %s196
      %p205 = scmp.eq.s32.totalorder %s27, 1
      %p206 = por %p204, %p205
      %p207 = scmp.ne.s32.totalorder %s196, %s197
      %p208 = scmp.eq.s32.totalorder %s27, 0
      %p209 = por %p207, %p208
      %p210 = scmp.ne.s32.totalorder %s196, %s197
      %p211 = scmp.eq.s32.totalorder %s28, 1
      %p212 = por %p210, %p211
      %p214 = scmp.ne.s32.totalorder %s197, %s213
      %p215 = scmp.eq.s32.totalorder %s28, 0
      %p216 = por %p214, %p215
      %p217 = scmp.le.s32.totalorder 1, %s22
      %p218 = scmp.lt.s32.totalorder %s22, 3
      %p219 = pnand %p217, %p218
      %p220 = pneg %p219
      // Predicated region
      $region9: #{tpu_custom_call.1} parent=5 // pred_check
        _
      $region10: #{tpu_custom_call.1} parent=5 // pred_check_branch
        %222 = sbr.rel (%p219) target = $region12
      $region11: #{tpu_custom_call.1} parent=5 // pred_region
        %s223 = ssub.s32 %s22, 1
        // Predicated region
        $region13: #{tpu_custom_call.1} parent=11 // pred_check
          %p224 = pneg %p139
        $region14: #{tpu_custom_call.1} parent=11 // pred_check_branch
          %226 = sbr.rel (%p224) target = $region16
        $region15: #{tpu_custom_call.1} parent=11 // pred_region
          _
        $region16: #{tpu_custom_call.1} parent=11 // pred_fallthru
          _
        // Predicated region
        $region17: #{tpu_custom_call.1} parent=11 // pred_check
          %p227 = pneg %p160
        $region18: #{tpu_custom_call.1} parent=11 // pred_check_branch
          %229 = sbr.rel (%p227) target = $region20
        $region19: #{tpu_custom_call.1} parent=11 // pred_region
          %s231 = ssub.s32 64, 64
          %232 = vsyncadd [#allocation9], %s231
          %s234 = sshll.u32 [#allocation8], 4
          %s235 = int_to_ptr.vmem [resolvable:$true] %s234
          %237 = dma.hbm_to_vmem [thread:$0]  %s4, 64, %s235, [#allocation9]
        $region20: #{tpu_custom_call.1} parent=11 // pred_fallthru
          _
        // Predicated region
        $region21: #{tpu_custom_call.1} parent=11 // pred_check
          %p238 = pneg %p181
        $region22: #{tpu_custom_call.1} parent=11 // pred_check_branch
          %240 = sbr.rel (%p238) target = $region24
        $region23: #{tpu_custom_call.1} parent=11 // pred_region
          _
        $region24: #{tpu_custom_call.1} parent=11 // pred_fallthru
          _
      $region12: #{tpu_custom_call.1} parent=5 // pred_fallthru
        _
      %p241 = scmp.lt.s32.totalorder %s22, 2
      // Predicated region
      $region25: #{tpu_custom_call.1} parent=5 // pred_check
        %p242 = pneg %p241
      $region26: #{tpu_custom_call.1} parent=5 // pred_check_branch
        %244 = sbr.rel (%p242) target = $region28
      $region27: #{tpu_custom_call.1} parent=5 // pred_region
        // Predicated region
        $region29: #{tpu_custom_call.1} parent=27 // pred_check
          %p245 = pneg %p56
        $region30: #{tpu_custom_call.1} parent=27 // pred_check_branch
          %247 = sbr.rel (%p245) target = $region32
        $region31: #{tpu_custom_call.1} parent=27 // pred_region
          %s248 = sand.u32 %s46, 1
          %s249 = scalar_lea.sflag [#allocation3], %s248
          %s250 = sand.u32 %s46, 1
          %s251 = smul.addr %s250, 8
          %s252 = scalar_lea.vmem [#allocation2], %s251
          %s253 = smul.u32 2, %s30
          %s255 = ssub.s32 128, 128
          %256 = vsyncadd %s249, %s255
          %s257 = smul.addr %s29, 2
          %s258 = sadd.s32 %s253, %s257
          %s259 = smul.addr %s258, 64
          %s260 = scalar_lea.hbm %s0, %s259
          %s262 = sshll.u32 %s252, 4
          %s263 = int_to_ptr.vmem [resolvable:$true] %s262
          %265 = dma.hbm_to_vmem [thread:$0]  %s260, 128, %s263, %s249
        $region32: #{tpu_custom_call.1} parent=27 // pred_fallthru
          _
        // Predicated region
        $region33: #{tpu_custom_call.1} parent=27 // pred_check
          %p266 = pneg %p84
        $region34: #{tpu_custom_call.1} parent=27 // pred_check_branch
          %268 = sbr.rel (%p266) target = $region36
        $region35: #{tpu_custom_call.1} parent=27 // pred_region
          %s269 = sand.u32 %s22, 1
          %s270 = scalar_lea.sflag [#allocation6], %s269
          %s271 = sand.u32 %s74, 1
          %s272 = smul.addr %s271, 8
          %s273 = scalar_lea.vmem [#allocation5], %s272
          %s274 = smul.u32 2, %s30
          %s276 = ssub.s32 128, 128
          %277 = vsyncadd %s270, %s276
          %s278 = smul.addr %s29, 2
          %s279 = sadd.s32 %s274, %s278
          %s280 = smul.addr %s279, 64
          %s281 = scalar_lea.hbm %s1, %s280
          %s283 = sshll.u32 %s273, 4
          %s284 = int_to_ptr.vmem [resolvable:$true] %s283
          %286 = dma.hbm_to_vmem [thread:$0]  %s281, 128, %s284, %s270
        $region36: #{tpu_custom_call.1} parent=27 // pred_fallthru
          _
        // Predicated region
        $region37: #{tpu_custom_call.1} parent=27 // pred_check
          %p287 = pneg %p112
        $region38: #{tpu_custom_call.1} parent=27 // pred_check_branch
          %289 = sbr.rel (%p287) target = $region40
        $region39: #{tpu_custom_call.1} parent=27 // pred_region
          %s290 = sand.u32 %s22, 1
          %s291 = scalar_lea.sflag [#allocation6], %s290
          %s292 = sand.u32 %s102, 1
          %s293 = smul.addr %s292, 8
          %s294 = scalar_lea.vmem [#allocation7], %s293
          %s295 = smul.u32 2, %s30
          %s297 = ssub.s32 128, 128
          %298 = vsyncadd %s291, %s297
          %s299 = smul.addr %s29, 2
          %s300 = sadd.s32 %s295, %s299
          %s301 = smul.addr %s300, 64
          %s302 = scalar_lea.hbm %s2, %s301
          %s304 = sshll.u32 %s294, 4
          %s305 = int_to_ptr.vmem [resolvable:$true] %s304
          %307 = dma.hbm_to_vmem [thread:$0]  %s302, 128, %s305, %s291
        $region40: #{tpu_custom_call.1} parent=27 // pred_fallthru
          _
      $region28: #{tpu_custom_call.1} parent=5 // pred_fallthru
        _
      %p308 = scmp.le.s32.totalorder 1, %s22
      %p309 = scmp.lt.s32.totalorder %s22, 3
      %p310 = pnand %p308, %p309
      %p311 = pneg %p310
      // Predicated region
      $region41: #{tpu_custom_call.1} parent=5 // pred_check
        _
      $region42: #{tpu_custom_call.1} parent=5 // pred_check_branch
        %313 = sbr.rel (%p310) target = $region44
      $region43: #{tpu_custom_call.1} parent=5 // pred_region
        %s314 = ssub.s32 %s22, 1
        %s315 = sand.u32 %s49, 1
        %s316 = scalar_lea.sflag [#allocation3], %s315
        %s317 = sand.u32 %s49, 1
        %s318 = smul.addr %s317, 8
        %s319 = scalar_lea.vmem [#allocation2], %s318
        // Predicated region
        $region45: #{tpu_custom_call.1} parent=43 // pred_check
          %p320 = pneg %p62
        $region46: #{tpu_custom_call.1} parent=43 // pred_check_branch
          %322 = sbr.rel (%p320) target = $region48
        $region47: #{tpu_custom_call.1} parent=43 // pred_region
          %323 = dma.done %s316, 128
        $region48: #{tpu_custom_call.1} parent=43 // pred_fallthru
          _
        %s324 = sand.u32 %s27, 1
        %s325 = scalar_lea.sflag [#allocation6], %s324
        %s326 = sand.u32 %s77, 1
        %s327 = smul.addr %s326, 8
        %s328 = scalar_lea.vmem [#allocation5], %s327
        // Predicated region
        $region49: #{tpu_custom_call.1} parent=43 // pred_check
          %p329 = pneg %p90
        $region50: #{tpu_custom_call.1} parent=43 // pred_check_branch
          %331 = sbr.rel (%p329) target = $region52
        $region51: #{tpu_custom_call.1} parent=43 // pred_region
          %332 = dma.done %s325, 128
        $region52: #{tpu_custom_call.1} parent=43 // pred_fallthru
          _
        %s333 = sand.u32 %s27, 1
        %s334 = scalar_lea.sflag [#allocation6], %s333
        %s335 = sand.u32 %s105, 1
        %s336 = smul.addr %s335, 8
        %s337 = scalar_lea.vmem [#allocation7], %s336
        // Predicated region
        $region53: #{tpu_custom_call.1} parent=43 // pred_check
          %p338 = pneg %p118
        $region54: #{tpu_custom_call.1} parent=43 // pred_check_branch
          %340 = sbr.rel (%p338) target = $region56
        $region55: #{tpu_custom_call.1} parent=43 // pred_region
          %341 = dma.done %s334, 128
        $region56: #{tpu_custom_call.1} parent=43 // pred_fallthru
          _
        // Predicated region
        $region57: #{tpu_custom_call.1} parent=43 // pred_check
          %p342 = pneg %p160
        $region58: #{tpu_custom_call.1} parent=43 // pred_check_branch
          %344 = sbr.rel (%p342) target = $region60
        $region59: #{tpu_custom_call.1} parent=43 // pred_region
          %345 = dma.done [#allocation9], 64
        $region60: #{tpu_custom_call.1} parent=43 // pred_fallthru
          _
        %s346 = sand.u32 %s49, 1
        %s347 = scalar_lea.sflag [#allocation3], %s346
        %s348 = sand.u32 %s49, 1
        %s349 = smul.addr %s348, 8
        %s350 = scalar_lea.vmem [#allocation2], %s349
        %p351 = pneg %p62
        %p352 = pneg %p59
        %s353 = sand.u32 %s27, 1
        %s354 = scalar_lea.sflag [#allocation6], %s353
        %s355 = sand.u32 %s77, 1
        %s356 = smul.addr %s355, 8
        %s357 = scalar_lea.vmem [#allocation5], %s356
        %p358 = pneg %p90
        %p359 = pneg %p87
        %s360 = sand.u32 %s27, 1
        %s361 = scalar_lea.sflag [#allocation6], %s360
        %s362 = sand.u32 %s105, 1
        %s363 = smul.addr %s362, 8
        %s364 = scalar_lea.vmem [#allocation7], %s363
        %p365 = pneg %p118
        %p366 = pneg %p115
        %p367 = pneg %p139
        %p368 = pneg %p136
        %p369 = pneg %p160
        %p370 = pneg %p157
        %p371 = pneg %p181
        %p372 = pneg %p178
        %p373 = pneg %p209
        %p374 = pneg %p206
        %s375 = sand.u32 %s196, 1
        %s376 = scalar_lea.sflag [#allocation4], %s375
        %s377 = sand.u32 %s196, 1
        %s378 = smul.addr %s377, 8
        %s379 = scalar_lea.vmem [#allocation10], %s378
        %s380 = smul.u32 2, %s32
        %s381 = smul.u32 2, %s32
        %s382 = smul.u32 2, %s32
        %s383 = smul.u32 2, %s32
        %v384 = vld [vmem:[%s319] sm:$0xff]
        %v385 = vld [vmem:[%s328] sm:$0xff]
        %v386 = vld [vmem:[%s337] sm:$0xff]
        %v387 = vmax.f32 %v384, %v385
        %v388 = vmax.f32 %v387, %v386
        %v389 = vmin.f32 %v384, %v385
        %v390 = vmin.f32 %v389, %v386
        %v391 = vadd.f32 %v384, %v385
        %v392 = vadd.f32 %v391, %v386
        %v393 = vld [vmem:[%s3] sm:$0xf]
        %v394 = vld [vmem:[#allocation8] sm:$0xf]
        %v396 = vcombine.high %v390, %v390
        %vm397 = vcmask 31744
        %v399 = vsel %vm397, %v394, 0
        %vm401 = vcmask 1043456
        %v402 = vsel %vm401, %v390, 0
        %v404 = vsel %vm401, %v396, 0
        %406 = vmatprep.subr.mxu0 0.0
        %407 = vmatpush1.msra.mxu0 0.0
        %408 = vmatprep.subr.mxu0 0.0
        %409 = vmatpush1.msra.mxu0 0.0
        %410 = vmatprep.subr.mxu0 0.0
        %411 = vmatpush1.msra.mxu0 0.0
        %412 = vmatprep.subr.mxu0 0.0
        %413 = vmatpush1.msra.mxu0 0.0
        %414 = vmatprep.subr.mxu0 0.0
        %415 = vmatpush1.msra.mxu0 0.0
        %416 = vmatprep.subr.mxu0 0.0
        %417 = vmatpush1.msra.mxu0 0.0
        %418 = vmatprep.subr.mxu0 0.0
        %419 = vmatpush1.msra.mxu0 0.0
        %420 = vmatprep.subr.mxu0 0.0
        %421 = vmatpush1.msra.mxu0 0.0
        %422 = vmatprep.subr.mxu0 0.0
        %423 = vmatpush1.msra.mxu0 0.0
        %424 = vmatprep.subr.mxu0 0.0
        %425 = vmatpush1.msra.mxu0 0.0
        %426 = vmatprep.subr.mxu0 0.0
        %427 = vmatpush1.msra.mxu0 0.0
        %428 = vmatprep.subr.mxu0 0.0
        %429 = vmatpush1.msra.mxu0 0.0
        %430 = vmatprep.subr.mxu0 0.0
        %431 = vmatpush1.msra.mxu0 0.0
        %432 = vmatprep.subr.mxu0 0.0
        %433 = vmatpush1.msra.mxu0 0.0
        %434 = vmatprep.subr.mxu0 0.0
        %435 = vmatpush1.msra.mxu0 0.0
        %436 = vmatprep.subr.mxu0 %v404
        %437 = vmatpush1.msra.mxu0 %v402
        %438 = vmatprep.subr.mxu0 0.0
        %439 = vmatpush2.msra.mxu0 0.0
        %440 = vmatprep.subr.mxu0 0.0
        %441 = vmatpush2.msra.mxu0 0.0
        %442 = vmatprep.subr.mxu0 0.0
        %443 = vmatpush2.msra.mxu0 0.0
        %444 = vmatprep.subr.mxu0 0.0
        %445 = vmatpush2.msra.mxu0 0.0
        %446 = vmatprep.subr.mxu0 0.0
        %447 = vmatpush2.msra.mxu0 0.0
        %448 = vmatprep.subr.mxu0 0.0
        %449 = vmatpush2.msra.mxu0 0.0
        %450 = vmatprep.subr.mxu0 0.0
        %451 = vmatpush2.msra.mxu0 0.0
        %452 = vmatprep.subr.mxu0 0.0
        %453 = vmatpush2.msra.mxu0 0.0
        %454 = vmatprep.subr.mxu0 0.0
        %455 = vmatpush2.msra.mxu0 0.0
        %456 = vmatprep.subr.mxu0 0.0
        %457 = vmatpush2.msra.mxu0 0.0
        %458 = vmatprep.subr.mxu0 0.0
        %459 = vmatpush2.msra.mxu0 0.0
        %460 = vmatprep.subr.mxu0 0.0
        %461 = vmatpush2.msra.mxu0 0.0
        %462 = vmatprep.subr.mxu0 0.0
        %463 = vmatpush2.msra.mxu0 0.0
        %464 = vmatprep.subr.mxu0 0.0
        %465 = vmatpush2.msra.mxu0 0.0
        %466 = vmatprep.subr.mxu0 0.0
        %467 = vmatpush2.msra.mxu0 0.0
        %468 = vmatprep.subr.mxu0 0.0
        %469 = vmatpush2.msra.mxu0 0.0
        %470 = vmatprep.mubr.f32.mxu0 0.0
        %471 = vmatmul.mubr.f32.gmra.mxu0 %v399
        %v472 = vpop.f32.mrf.mxu0
        %v473 = vadd.f32 0.0, %v472
        %v474 = vpop.f32.mrf.mxu0
        %v475 = vadd.f32 0.0, %v474
        %476 = vdwg.mxu0
        %v478 = vcombine.high %v388, %v388
        %v480 = vsel %vm397, %v393, 0
        %v482 = vsel %vm401, %v388, 0
        %v484 = vsel %vm401, %v478, 0
        %486 = vmatprep.subr.mxu0 0.0
        %487 = vmatpush1.msra.mxu0 0.0
        %488 = vmatprep.subr.mxu0 0.0
        %489 = vmatpush1.msra.mxu0 0.0
        %490 = vmatprep.subr.mxu0 0.0
        %491 = vmatpush1.msra.mxu0 0.0
        %492 = vmatprep.subr.mxu0 0.0
        %493 = vmatpush1.msra.mxu0 0.0
        %494 = vmatprep.subr.mxu0 0.0
        %495 = vmatpush1.msra.mxu0 0.0
        %496 = vmatprep.subr.mxu0 0.0
        %497 = vmatpush1.msra.mxu0 0.0
        %498 = vmatprep.subr.mxu0 0.0
        %499 = vmatpush1.msra.mxu0 0.0
        %500 = vmatprep.subr.mxu0 0.0
        %501 = vmatpush1.msra.mxu0 0.0
        %502 = vmatprep.subr.mxu0 0.0
        %503 = vmatpush1.msra.mxu0 0.0
        %504 = vmatprep.subr.mxu0 0.0
        %505 = vmatpush1.msra.mxu0 0.0
        %506 = vmatprep.subr.mxu0 0.0
        %507 = vmatpush1.msra.mxu0 0.0
        %508 = vmatprep.subr.mxu0 0.0
        %509 = vmatpush1.msra.mxu0 0.0
        %510 = vmatprep.subr.mxu0 0.0
        %511 = vmatpush1.msra.mxu0 0.0
        %512 = vmatprep.subr.mxu0 0.0
        %513 = vmatpush1.msra.mxu0 0.0
        %514 = vmatprep.subr.mxu0 0.0
        %515 = vmatpush1.msra.mxu0 0.0
        %516 = vmatprep.subr.mxu0 %v484
        %517 = vmatpush1.msra.mxu0 %v482
        %518 = vmatprep.subr.mxu0 0.0
        %519 = vmatpush2.msra.mxu0 0.0
        %520 = vmatprep.subr.mxu0 0.0
        %521 = vmatpush2.msra.mxu0 0.0
        %522 = vmatprep.subr.mxu0 0.0
        %523 = vmatpush2.msra.mxu0 0.0
        %524 = vmatprep.subr.mxu0 0.0
        %525 = vmatpush2.msra.mxu0 0.0
        %526 = vmatprep.subr.mxu0 0.0
        %527 = vmatpush2.msra.mxu0 0.0
        %528 = vmatprep.subr.mxu0 0.0
        %529 = vmatpush2.msra.mxu0 0.0
        %530 = vmatprep.subr.mxu0 0.0
        %531 = vmatpush2.msra.mxu0 0.0
        %532 = vmatprep.subr.mxu0 0.0
        %533 = vmatpush2.msra.mxu0 0.0
        %534 = vmatprep.subr.mxu0 0.0
        %535 = vmatpush2.msra.mxu0 0.0
        %536 = vmatprep.subr.mxu0 0.0
        %537 = vmatpush2.msra.mxu0 0.0
        %538 = vmatprep.subr.mxu0 0.0
        %539 = vmatpush2.msra.mxu0 0.0
        %540 = vmatprep.subr.mxu0 0.0
        %541 = vmatpush2.msra.mxu0 0.0
        %542 = vmatprep.subr.mxu0 0.0
        %543 = vmatpush2.msra.mxu0 0.0
        %544 = vmatprep.subr.mxu0 0.0
        %545 = vmatpush2.msra.mxu0 0.0
        %546 = vmatprep.subr.mxu0 0.0
        %547 = vmatpush2.msra.mxu0 0.0
        %548 = vmatprep.subr.mxu0 0.0
        %549 = vmatpush2.msra.mxu0 0.0
        %550 = vmatprep.mubr.f32.mxu0 0.0
        %551 = vmatmul.mubr.f32.gmra.mxu0 %v480
        %v552 = vpop.f32.mrf.mxu0
        %v553 = vadd.f32 %v473, %v552
        %v554 = vpop.f32.mrf.mxu0
        %v555 = vadd.f32 %v475, %v554
        %556 = vdwg.mxu0
        %v557 = vld [vmem:[%s5] sm:$0xf]
        %v559 = vcombine.high %v392, %v392
        %v561 = vsel %vm397, %v557, 0
        %v563 = vsel %vm401, %v392, 0
        %v565 = vsel %vm401, %v559, 0
        %567 = vmatprep.subr.mxu0 0.0
        %568 = vmatpush1.msra.mxu0 0.0
        %569 = vmatprep.subr.mxu0 0.0
        %570 = vmatpush1.msra.mxu0 0.0
        %571 = vmatprep.subr.mxu0 0.0
        %572 = vmatpush1.msra.mxu0 0.0
        %573 = vmatprep.subr.mxu0 0.0
        %574 = vmatpush1.msra.mxu0 0.0
        %575 = vmatprep.subr.mxu0 0.0
        %576 = vmatpush1.msra.mxu0 0.0
        %577 = vmatprep.subr.mxu0 0.0
        %578 = vmatpush1.msra.mxu0 0.0
        %579 = vmatprep.subr.mxu0 0.0
        %580 = vmatpush1.msra.mxu0 0.0
        %581 = vmatprep.subr.mxu0 0.0
        %582 = vmatpush1.msra.mxu0 0.0
        %583 = vmatprep.subr.mxu0 0.0
        %584 = vmatpush1.msra.mxu0 0.0
        %585 = vmatprep.subr.mxu0 0.0
        %586 = vmatpush1.msra.mxu0 0.0
        %587 = vmatprep.subr.mxu0 0.0
        %588 = vmatpush1.msra.mxu0 0.0
        %589 = vmatprep.subr.mxu0 0.0
        %590 = vmatpush1.msra.mxu0 0.0
        %591 = vmatprep.subr.mxu0 0.0
        %592 = vmatpush1.msra.mxu0 0.0
        %593 = vmatprep.subr.mxu0 0.0
        %594 = vmatpush1.msra.mxu0 0.0
        %595 = vmatprep.subr.mxu0 0.0
        %596 = vmatpush1.msra.mxu0 0.0
        %597 = vmatprep.subr.mxu0 %v565
        %598 = vmatpush1.msra.mxu0 %v563
        %599 = vmatprep.subr.mxu0 0.0
        %600 = vmatpush2.msra.mxu0 0.0
        %601 = vmatprep.subr.mxu0 0.0
        %602 = vmatpush2.msra.mxu0 0.0
        %603 = vmatprep.subr.mxu0 0.0
        %604 = vmatpush2.msra.mxu0 0.0
        %605 = vmatprep.subr.mxu0 0.0
        %606 = vmatpush2.msra.mxu0 0.0
        %607 = vmatprep.subr.mxu0 0.0
        %608 = vmatpush2.msra.mxu0 0.0
        %609 = vmatprep.subr.mxu0 0.0
        %610 = vmatpush2.msra.mxu0 0.0
        %611 = vmatprep.subr.mxu0 0.0
        %612 = vmatpush2.msra.mxu0 0.0
        %613 = vmatprep.subr.mxu0 0.0
        %614 = vmatpush2.msra.mxu0 0.0
        %615 = vmatprep.subr.mxu0 0.0
        %616 = vmatpush2.msra.mxu0 0.0
        %617 = vmatprep.subr.mxu0 0.0
        %618 = vmatpush2.msra.mxu0 0.0
        %619 = vmatprep.subr.mxu0 0.0
        %620 = vmatpush2.msra.mxu0 0.0
        %621 = vmatprep.subr.mxu0 0.0
        %622 = vmatpush2.msra.mxu0 0.0
        %623 = vmatprep.subr.mxu0 0.0
        %624 = vmatpush2.msra.mxu0 0.0
        %625 = vmatprep.subr.mxu0 0.0
        %626 = vmatpush2.msra.mxu0 0.0
        %627 = vmatprep.subr.mxu0 0.0
        %628 = vmatpush2.msra.mxu0 0.0
        %629 = vmatprep.subr.mxu0 0.0
        %630 = vmatpush2.msra.mxu0 0.0
        %631 = vmatprep.mubr.f32.mxu0 0.0
        %632 = vmatmul.mubr.f32.gmra.mxu0 %v561
        %v633 = vpop.f32.mrf.mxu0
        %v634 = vadd.f32 0.0, %v633
        %v635 = vpop.f32.mrf.mxu0
        %v636 = vadd.f32 0.0, %v635
        %637 = vdwg.mxu0
        %v638 = vadd.f32 %v553, %v634
        %v639 = vadd.f32 %v555, %v636
        %v642 = vcombine.low %v638, %v639
        %644 = vst [vmem:[%s379] sm:$0xff] %v642
        %s645 = sand.u32 %s196, 1
        %s646 = scalar_lea.sflag [#allocation4], %s645
        %s647 = sand.u32 %s196, 1
        %s648 = smul.addr %s647, 8
        %s649 = scalar_lea.vmem [#allocation10], %s648
        // Predicated region
        $region61: #{tpu_custom_call.1} parent=43 // pred_check
          %p650 = pneg %p206
        $region62: #{tpu_custom_call.1} parent=43 // pred_check_branch
          %652 = sbr.rel (%p650) target = $region64
        $region63: #{tpu_custom_call.1} parent=43 // pred_region
          %s653 = smul.u32 2, %s32
          %s655 = ssub.s32 128, 128
          %656 = vsyncadd %s646, %s655
          %s657 = smul.addr %s31, 2
          %s658 = sadd.s32 %s653, %s657
          %s659 = smul.addr %s658, 64
          %s660 = scalar_lea.hbm %s6, %s659
          %s662 = sshll.u32 %s649, 4
          %s663 = int_to_ptr.vmem [resolvable:$true] %s662
          %665 = dma.vmem_to_hbm [thread:$0]  %s663, 128, %s660, %s646
        $region64: #{tpu_custom_call.1} parent=43 // pred_fallthru
          _
      $region44: #{tpu_custom_call.1} parent=5 // pred_fallthru
        _
      %p666 = scmp.le.s32.totalorder 2, %s22
      // Predicated region
      $region65: #{tpu_custom_call.1} parent=5 // pred_check
        %p667 = pneg %p666
      $region66: #{tpu_custom_call.1} parent=5 // pred_check_branch
        %669 = sbr.rel (%p667) target = $region68
      $region67: #{tpu_custom_call.1} parent=5 // pred_region
        %s670 = ssub.s32 %s22, 2
        // Predicated region
        $region69: #{tpu_custom_call.1} parent=67 // pred_check
          %p671 = pneg %p212
        $region70: #{tpu_custom_call.1} parent=67 // pred_check_branch
          %673 = sbr.rel (%p671) target = $region72
        $region71: #{tpu_custom_call.1} parent=67 // pred_region
          %s674 = sand.u32 %s197, 1
          %s675 = scalar_lea.sflag [#allocation4], %s674
          %s676 = sand.u32 %s197, 1
          %s677 = smul.addr %s676, 8
          %s678 = scalar_lea.vmem [#allocation10], %s677
          %679 = dma.done %s675, 128
        $region72: #{tpu_custom_call.1} parent=67 // pred_fallthru
          _
      $region68: #{tpu_custom_call.1} parent=5 // pred_fallthru
        _
    $region6: #{tpu_custom_call.1} parent=1 // loop_footer
      %s26 = sadd.s32 1, %s22
    $region7: #{tpu_custom_call.1} parent=1 // loop_footer_branch
      %21 = sbr.rel target = $region3
    $region8: #{tpu_custom_call.1} parent=1 // loop_exit
      _
    %680 = vsyncpa [#allocation3], 1
    %s681 = scalar_lea.sflag [#allocation3], 1
    %682 = vsyncpa %s681, 1
    %683 = vsyncpa [#allocation6], 1
    %s684 = scalar_lea.sflag [#allocation6], 1
    %685 = vsyncpa %s684, 1
    %686 = vsyncpa [#allocation9], 1
    %687 = vsyncpa [#allocation4], 1
    %s688 = scalar_lea.sflag [#allocation4], 1
    %689 = vsyncpa %s688, 1

</llo_original>
